<compile_context>
chip_gen: v7x
topology: tpu7x:2x2x1
jax: 0.10.0
libtpu: 0.0.40
codegen_flags: <defaults>
</compile_context>

<pallas_src>
import functools

import jax
import jax.numpy as jnp
from jax.experimental import pallas as pl
from jax.experimental.pallas import tpu as pltpu

_LANE = 128
_BLOCK_BUDGET_BYTES = 2 * 1024 * 1024  # per-input, per-buffer block budget


def _masked_sq_kernel(pred_ref, target_ref, valid_ref, out_ref, *, acc_rows, fold):
    # grid = (B, nh, nw); the output block is indexed by (b, h) only, so it
    # stays VMEM-resident across the innermost w axis and accumulates there.
    @pl.when(pl.program_id(2) == 0)
    def _init():
        out_ref[...] = jnp.zeros_like(out_ref)

    pred = pred_ref[0].astype(jnp.float32)      # (C, TH, TW)
    target = target_ref[0].astype(jnp.float32)  # (C, TH, TW)
    diff = target - pred
    ssum = jnp.sum(diff * diff, axis=0)         # (TH, TW), reduce over channels (VPU)
    # Mask is {0,1}; use where so any non-finite garbage at masked pixels
    # cannot leak into the sum (matches the boolean-indexing reference).
    masked = jnp.where(valid_ref[0, 0] != 0, ssum, jnp.float32(0.0))

    # Fold TH rows onto an (acc_rows, TW) lane-dense accumulator with static,
    # sublane-aligned slices (cheap VPU adds; keeps output writeback small).
    acc = masked[0:acc_rows, :]
    for i in range(1, fold):
        acc = acc + masked[i * acc_rows:(i + 1) * acc_rows, :]
    out_ref[0, 0] += acc


def _largest_tile(extent, unit, cap):
    """Largest multiple of `unit` dividing `extent` that is <= cap (>= unit)."""
    best = unit
    d = unit
    lim = min(extent, cap)
    while d <= lim:
        if extent % d == 0:
            best = d
        d += unit
    return best


def masked_rmse_loss(pred, target, sky_mask):
    """pred/target: (B, C, H, W) float (f32 or bf16); sky_mask: (B, 1, H, W) bool.

    Returns sqrt(mean((target - pred)**2 over pixels where ~sky_mask)), with the
    mask broadcast across channels -- exactly the reference module.  All-masked
    input yields NaN (same as the PyTorch reference).
    """
    assert pred.ndim == target.ndim, "inconsistent dimensions"
    B, C, H, W = pred.shape
    in_itemsize = max(pred.dtype.itemsize, target.dtype.itemsize)

    # --- W (lane) tile: multiple of 128 dividing W, else full extent. ---
    if W % _LANE == 0:
        TW = _largest_tile(W, _LANE, 512)
    else:
        TW = W

    # --- H (sublane) tile: layout-friendly divisor within the VMEM budget. ---
    if H % 32 == 0:
        th_unit = 32
    elif H % 16 == 0:
        th_unit = 16
    elif H % 8 == 0:
        th_unit = 8
    else:
        th_unit = None

    if th_unit is None:
        TH = H  # full extent is always layout-legal
    else:
        max_th = max(th_unit, _BLOCK_BUDGET_BYTES // (C * TW * in_itemsize))
        TH = _largest_tile(H, th_unit, max_th)

    # --- Mask dtype: smallest dtype whose sublane packing the tile satisfies. ---
    if TH == H or TH % 32 == 0:
        mask_dtype = jnp.int8
    elif TH % 16 == 0:
        mask_dtype = jnp.bfloat16
    else:
        mask_dtype = jnp.float32

    # --- Accumulator fold (TH rows -> acc_rows sublanes). ---
    if TH % 8 == 0:
        acc_rows = 8
    else:
        acc_rows = TH
    fold = TH // acc_rows

    nh = H // TH
    nw = W // TW

    valid = jnp.logical_not(sky_mask).astype(mask_dtype)  # (B, 1, H, W), tiny traffic

    out_bytes = B * nh * acc_rows * TW * 4
    kernel = functools.partial(_masked_sq_kernel, acc_rows=acc_rows, fold=fold)

    partials = pl.pallas_call(
        kernel,
        out_shape=jax.ShapeDtypeStruct((B, nh, acc_rows, TW), jnp.float32),
        grid=(B, nh, nw),
        in_specs=[
            pl.BlockSpec((1, C, TH, TW), lambda b, h, w: (b, 0, h, w)),
            pl.BlockSpec((1, C, TH, TW), lambda b, h, w: (b, 0, h, w)),
            pl.BlockSpec((1, 1, TH, TW), lambda b, h, w: (b, 0, h, w)),
        ],
        out_specs=pl.BlockSpec((1, 1, acc_rows, TW), lambda b, h, w: (b, h, 0, 0)),
        compiler_params=pltpu.CompilerParams(
            # batch and H-chunk axes own disjoint output blocks -> parallel
            # (2-TC split on v7x even when B is small); W-chunk accumulates.
            dimension_semantics=("parallel", "parallel", "arbitrary"),
            vmem_limit_bytes=32 * 1024 * 1024,
        ),
        cost_estimate=pl.CostEstimate(
            flops=4 * B * C * H * W,
            transcendentals=0,
            bytes_accessed=(pred.size * pred.dtype.itemsize
                            + target.size * target.dtype.itemsize
                            + valid.size * valid.dtype.itemsize
                            + out_bytes),
        ),
    )(pred, target, valid)

    total_sum = jnp.sum(partials)
    # Exact integer denominator from the tiny bool mask (broadcast across C).
    denom = (jnp.count_nonzero(jnp.logical_not(sky_mask)) * C).astype(jnp.float32)
    return jnp.sqrt(total_sum / denom)


def _reference(pred, target, sky_mask):
    valid = jnp.broadcast_to(jnp.logical_not(sky_mask), pred.shape)
    diff = jnp.where(valid, target.astype(jnp.float32) - pred.astype(jnp.float32), 0.0)
    denom = jnp.sum(valid.astype(jnp.float32))
    return jnp.sqrt(jnp.sum(diff * diff) / denom)


if __name__ == "__main__":
    key = jax.random.PRNGKey(0)
    ks = jax.random.split(key, 10)

    def check(pred, target, sky_mask):
        out = jax.block_until_ready(masked_rmse_loss(pred, target, sky_mask))
        ref = jax.block_until_ready(_reference(pred, target, sky_mask))
        assert jnp.allclose(out, ref, rtol=1e-4, atol=1e-6), (out, ref)

    # C == 3 path: mask repeated across channels (as in the PyTorch module).
    B, C, H, W = 2, 3, 16, 16
    pred = jax.random.normal(ks[0], (B, C, H, W), dtype=jnp.float32)
    target = jax.random.normal(ks[1], (B, C, H, W), dtype=jnp.float32)
    sky_mask = jax.random.bernoulli(ks[2], p=0.3, shape=(B, 1, H, W))
    check(pred, target, sky_mask)

    # C == 1 path (e.g. depth prediction), same mask.
    pred1 = jax.random.normal(ks[3], (B, 1, H, W), dtype=jnp.float32)
    target1 = jax.random.normal(ks[4], (B, 1, H, W), dtype=jnp.float32)
    check(pred1, target1, sky_mask)

    # Multi-chunk W (lane tiling + accumulation over the arbitrary axis), bf16 inputs.
    B2, C2, H2, W2 = 1, 3, 64, 1024
    p2 = jax.random.normal(ks[5], (B2, C2, H2, W2), dtype=jnp.bfloat16)
    t2 = jax.random.normal(ks[6], (B2, C2, H2, W2), dtype=jnp.bfloat16)
    m2 = jax.random.bernoulli(ks[7], p=0.5, shape=(B2, 1, H2, W2))
    check(p2, t2, m2)

    # Awkward spatial extents (H % 8 != 0, W % 128 != 0): full-extent blocks, no padding.
    B3, C3, H3, W3 = 2, 3, 20, 48
    p3 = jax.random.normal(ks[8], (B3, C3, H3, W3), dtype=jnp.float32)
    t3 = jax.random.normal(ks[9], (B3, C3, H3, W3), dtype=jnp.float32)
    m3 = jax.random.bernoulli(ks[2], p=0.3, shape=(B3, 1, H3, W3))
    check(p3, t3, m3)

    print("KERNEL_OK")
</pallas_src>

<mosaic_0001>
module attributes {stable_mosaic.version = 11 : i64} {
  func.func @_masked_sq_kernel(%arg0: i32, %arg1: i32, %arg2: i32, %arg3: memref<1x3x16x16xf32, #tpu.memory_space<vmem>>, %arg4: memref<1x3x16x16xf32, #tpu.memory_space<vmem>>, %arg5: memref<1x1x16x16xi8, #tpu.memory_space<vmem>>, %arg6: memref<1x1x8x16xf32, #tpu.memory_space<vmem>>) attributes {dimension_semantics = [#tpu.dimension_semantics<parallel>, #tpu.dimension_semantics<parallel>, #tpu.dimension_semantics<arbitrary>], iteration_bounds = array<i64: 2, 1, 1>, scalar_prefetch = 0 : i64, scratch_operands = 0 : i64, tpu.core_type = #tpu.core_type<tc>, window_params = [{transform_indices = @transform_0, window_bounds = array<i64: 1, 3, 16, 16>}, {transform_indices = @transform_1, window_bounds = array<i64: 1, 3, 16, 16>}, {transform_indices = @transform_2, window_bounds = array<i64: 1, 1, 16, 16>}, {transform_indices = @transform_3, window_bounds = array<i64: 1, 1, 8, 16>}]} {
    %c0_i32 = arith.constant 0 : i32
    %0 = arith.cmpi eq, %arg2, %c0_i32 : i32
    %1 = arith.extui %0 : i1 to i32
    %c0_i32_0 = arith.constant 0 : i32
    %2 = arith.cmpi ne, %1, %c0_i32_0 : i32
    scf.if %2 {
      %cst_21 = arith.constant 0.000000e+00 : f32
      %25 = vector.broadcast %cst_21 : f32 to vector<1x1x8x16xf32>
      %c0_22 = arith.constant 0 : index
      %c0_23 = arith.constant 0 : index
      %c0_24 = arith.constant 0 : index
      %c0_25 = arith.constant 0 : index
      %26 = vector.load %arg6[%c0_22, %c0_23, %c0_24, %c0_25] : memref<1x1x8x16xf32, #tpu.memory_space<vmem>>, vector<1x1x8x16xf32>
      tpu.vector_store %arg6[%c0_22, %c0_23, %c0_24, %c0_25], %25 {strides = array<i32>} : memref<1x1x8x16xf32, #tpu.memory_space<vmem>>, vector<1x1x8x16xf32>,
    } else {
    }
    %c0 = arith.constant 0 : index
    %c0_1 = arith.constant 0 : index
    %c0_2 = arith.constant 0 : index
    %c0_3 = arith.constant 0 : index
    %3 = vector.load %arg3[%c0, %c0_1, %c0_2, %c0_3] : memref<1x3x16x16xf32, #tpu.memory_space<vmem>>, vector<1x3x16x16xf32>
    %4 = vector.shape_cast %3 : vector<1x3x16x16xf32> to vector<3x16x16xf32>
    %c0_4 = arith.constant 0 : index
    %c0_5 = arith.constant 0 : index
    %c0_6 = arith.constant 0 : index
    %c0_7 = arith.constant 0 : index
    %5 = vector.load %arg4[%c0_4, %c0_5, %c0_6, %c0_7] : memref<1x3x16x16xf32, #tpu.memory_space<vmem>>, vector<1x3x16x16xf32>
    %6 = vector.shape_cast %5 : vector<1x3x16x16xf32> to vector<3x16x16xf32>
    %7 = arith.subf %6, %4 : vector<3x16x16xf32>
    %8 = arith.mulf %7, %7 : vector<3x16x16xf32>
    %cst = arith.constant dense<0.000000e+00> : vector<16x16xf32>
    %9 = vector.multi_reduction <add>, %8, %cst [0] : vector<3x16x16xf32> to vector<16x16xf32>
    %c0_8 = arith.constant 0 : index
    %c0_9 = arith.constant 0 : index
    %c0_10 = arith.constant 0 : index
    %c0_11 = arith.constant 0 : index
    %10 = vector.load %arg5[%c0_8, %c0_9, %c0_10, %c0_11] : memref<1x1x16x16xi8, #tpu.memory_space<vmem>>, vector<1x1x16x16xi8>
    %11 = vector.shape_cast %10 : vector<1x1x16x16xi8> to vector<16x16xi8>
    %c0_i8 = arith.constant 0 : i8
    %12 = vector.broadcast %c0_i8 : i8 to vector<16x16xi8>
    %13 = arith.cmpi ne, %11, %12 : vector<16x16xi8>
    %cst_12 = arith.constant 0.000000e+00 : f32
    %14 = vector.broadcast %cst_12 : f32 to vector<16x16xf32>
    %15 = arith.select %13, %9, %14 : vector<16x16xi1>, vector<16x16xf32>
    %16 = vector.extract_strided_slice %15 {offsets = [0, 0], sizes = [8, 16], strides = [1, 1]} : vector<16x16xf32> to vector<8x16xf32>
    %17 = vector.extract_strided_slice %15 {offsets = [8, 0], sizes = [8, 16], strides = [1, 1]} : vector<16x16xf32> to vector<8x16xf32>
    %18 = arith.addf %16, %17 : vector<8x16xf32>
    %c0_13 = arith.constant 0 : index
    %c0_14 = arith.constant 0 : index
    %c0_15 = arith.constant 0 : index
    %c0_16 = arith.constant 0 : index
    %19 = vector.load %arg6[%c0_13, %c0_14, %c0_15, %c0_16] : memref<1x1x8x16xf32, #tpu.memory_space<vmem>>, vector<1x1x8x16xf32>
    %20 = vector.shape_cast %19 : vector<1x1x8x16xf32> to vector<8x16xf32>
    %21 = arith.addf %20, %18 : vector<8x16xf32>
    %c0_17 = arith.constant 0 : index
    %c0_18 = arith.constant 0 : index
    %c0_19 = arith.constant 0 : index
    %c0_20 = arith.constant 0 : index
    %22 = vector.load %arg6[%c0_17, %c0_18, %c0_19, %c0_20] : memref<1x1x8x16xf32, #tpu.memory_space<vmem>>, vector<1x1x8x16xf32>
    %23 = vector.shape_cast %22 : vector<1x1x8x16xf32> to vector<8x16xf32>
    %24 = vector.shape_cast %21 : vector<8x16xf32> to vector<1x1x8x16xf32>
    tpu.vector_store %arg6[%c0_17, %c0_18, %c0_19, %c0_20], %24 {strides = array<i32>} : memref<1x1x8x16xf32, #tpu.memory_space<vmem>>, vector<1x1x8x16xf32>,
    return
  }
  func.func @transform_0(%arg0: i32, %arg1: i32, %arg2: i32) -> (i32, i32, i32, i32) {
    %c0_i32 = arith.constant 0 : i32
    %c0_i32_0 = arith.constant 0 : i32
    return %arg0, %c0_i32, %arg1, %arg2 : i32, i32, i32, i32
  }
  func.func @transform_1(%arg0: i32, %arg1: i32, %arg2: i32) -> (i32, i32, i32, i32) {
    %c0_i32 = arith.constant 0 : i32
    %c0_i32_0 = arith.constant 0 : i32
    return %arg0, %c0_i32, %arg1, %arg2 : i32, i32, i32, i32
  }
  func.func @transform_2(%arg0: i32, %arg1: i32, %arg2: i32) -> (i32, i32, i32, i32) {
    %c0_i32 = arith.constant 0 : i32
    %c0_i32_0 = arith.constant 0 : i32
    return %arg0, %c0_i32, %arg1, %arg2 : i32, i32, i32, i32
  }
  func.func @transform_3(%arg0: i32, %arg1: i32, %arg2: i32) -> (i32, i32, i32, i32) {
    %c0_i32 = arith.constant 0 : i32
    %c0_i32_0 = arith.constant 0 : i32
    %c0_i32_1 = arith.constant 0 : i32
    return %arg0, %arg1, %c0_i32, %c0_i32_0 : i32, i32, i32, i32
  }
}

</mosaic_0001>

<llo_original>
// kernel: tpu_custom_call.1
$region0: #{tpu_custom_call.1}
  #allocation0 [shape = 'u32[]', space=smem, size = 0x4, offset = 0x4, fixed_abs, tag = 'smem constant byte address 0x4 - core index']
  #allocation1 [shape = 'u32[144,128]{1,0:T(1,128)}', space=vmem, size = 0x12000, scoped, tag = 'internal scratch']
  %s0 = inlined_call_operand.hbm [shape: f32[2,3,16,16], index: 0, kind: input, shape index: {}]
  %s1 = inlined_call_operand.hbm [shape: f32[2,3,16,16], index: 1, kind: input, shape index: {}]
  %s2 = inlined_call_operand.hbm [shape: s8[2,1,16,16], index: 2, kind: input, shape index: {}]
  %s3 = inlined_call_operand.hbm [shape: f32[2,1,8,16], index: 3, kind: output, shape index: {}]
  %s4 = sld [smem:[#allocation0]]
  $region61: #{tpu_custom_call.1} parent=0
    _
  %s6 = ssub.s32 1, %s4
  %s7 = scalar_select 0, %s6, %s4
  $region1: #{tpu_custom_call.1} parent=0
    #allocation2 [shape = 'u8[49152]{0}', space=vmem, size = 0xc000, scoped, tag = 'input window, operand 0']
    #allocation3 [shape = 's32[2]{0}', space=sflag, size = 0x8, scoped, tag = 'scoped memory for tpu_custom_call.1']
    #allocation4 [shape = 's32[2]{0}', space=sflag, size = 0x8, scoped, tag = 'scoped memory for tpu_custom_call.1']
    #allocation5 [shape = 'u8[49152]{0}', space=vmem, size = 0xc000, scoped, tag = 'input window, operand 1']
    #allocation6 [shape = 's32[2]{0}', space=sflag, size = 0x8, scoped, tag = 'scoped memory for tpu_custom_call.1']
    #allocation7 [shape = 'u8[4096]{0}', space=vmem, size = 0x1000, scoped, tag = 'input window, operand 2']
    #allocation8 [shape = 'u8[8192]{0}', space=vmem, size = 0x2000, scoped, tag = 'output window, operand 0']
    %8 = vsyncpa [#allocation3], 0
    %s9 = scalar_lea.sflag [#allocation3], 1
    %10 = vsyncpa %s9, 0
    %11 = vsyncpa [#allocation6], 0
    %s12 = scalar_lea.sflag [#allocation6], 1
    %13 = vsyncpa %s12, 0
    %14 = vsyncpa [#allocation4], 0
    %s15 = scalar_lea.sflag [#allocation4], 1
    %16 = vsyncpa %s15, 0
    loop: start=0, step=1, limit=4
    $region2: #{tpu_custom_call.1} parent=1 // loop_pre_header
      _
    $region3: #{tpu_custom_call.1} parent=1 // loop_header
      %s18 = sphi 0, %s22
      %p19 = scmp.ge.s32.totalorder %s18, 4
      %s25 = sphi 0, %s44
      %s26 = sphi 0, %s40
      %s27 = sphi 0, %s36
      %s28 = sphi 0, %s25
      %s29 = sphi 0, %s26
      %s30 = sphi 0, %s27
      %s31 = sphi 0, %s28
      %s32 = sphi 0, %s29
      %s33 = sphi 0, %s30
      %s51 = sphi 0, %s53
      %s54 = sphi 0, %s51
      %s55 = sphi 0, %s54
      %s71 = sphi 0, %s55
      %s81 = sphi 0, %s83
      %s84 = sphi 0, %s81
      %s85 = sphi 0, %s84
      %s101 = sphi 0, %s85
      %s111 = sphi 0, %s113
      %s114 = sphi 0, %s111
      %s115 = sphi 0, %s114
      %s131 = sphi 0, %s115
      %s139 = sphi 0, %s141
      %s142 = sphi 0, %s139
      %s143 = sphi 0, %s142
      %s159 = sphi 0, %s143
    $region4: #{tpu_custom_call.1} parent=1 // loop_header_branch
      %21 = sbr.rel (%p19) target = $region8
    $region5: #{tpu_custom_call.1} parent=1 // loop_body
      %s23 = ssub.s32 %s18, 1
      %s24 = ssub.s32 %s18, 2
      %s34 = sadd.s32 1, %s27
      %p35 = scmp.ge.s32.totalorder %s34, 1
      %s36 = scalar_select %p35, 0, %s34
      %s37 = sadd.s32 1, %s26
      %s38 = scalar_select %p35, %s37, %s26
      %p39 = scmp.ge.s32.totalorder %s38, 1
      %s40 = scalar_select %p39, 0, %s38
      %s41 = sadd.s32 1, %s25
      %s42 = scalar_select %p39, %s41, %s25
      %p43 = scmp.ge.s32.totalorder %s42, 2
      %s44 = scalar_select %p43, 0, %s42
      %s45 = ssub.s32 %s25, %s44
      %s46 = ssub.s32 %s26, %s40
      %s47 = sor.u32 %s45, %s46
      %s48 = ssub.s32 %s27, %s36
      %s49 = sor.u32 %s47, %s48
      %p50 = scmp.eq.s32.totalorder %s49, 0
      %s52 = sadd.s32 %s51, 1
      %s53 = scalar_select %p50, %s51, %s52
      %p56 = pneg %p50
      %p57 = scmp.eq.s32.totalorder %s18, 1
      %p58 = por %p56, %p57
      %p59 = scmp.ne.s32.totalorder %s51, %s54
      %p60 = scmp.eq.s32.totalorder %s18, 0
      %p61 = por %p59, %p60
      %p62 = scmp.ne.s32.totalorder %s51, %s54
      %p63 = scmp.eq.s32.totalorder %s23, 1
      %p64 = por %p62, %p63
      %p65 = scmp.ne.s32.totalorder %s54, %s55
      %p66 = scmp.eq.s32.totalorder %s23, 0
      %p67 = por %p65, %p66
      %p68 = scmp.ne.s32.totalorder %s54, %s55
      %p69 = scmp.eq.s32.totalorder %s24, 1
      %p70 = por %p68, %p69
      %p72 = scmp.ne.s32.totalorder %s55, %s71
      %p73 = scmp.eq.s32.totalorder %s24, 0
      %p74 = por %p72, %p73
      %s75 = ssub.s32 %s25, %s44
      %s76 = ssub.s32 %s26, %s40
      %s77 = sor.u32 %s75, %s76
      %s78 = ssub.s32 %s27, %s36
      %s79 = sor.u32 %s77, %s78
      %p80 = scmp.eq.s32.totalorder %s79, 0
      %s82 = sadd.s32 %s81, 1
      %s83 = scalar_select %p80, %s81, %s82
      %p86 = pneg %p80
      %p87 = scmp.eq.s32.totalorder %s18, 1
      %p88 = por %p86, %p87
      %p89 = scmp.ne.s32.totalorder %s81, %s84
      %p90 = scmp.eq.s32.totalorder %s18, 0
      %p91 = por %p89, %p90
      %p92 = scmp.ne.s32.totalorder %s81, %s84
      %p93 = scmp.eq.s32.totalorder %s23, 1
      %p94 = por %p92, %p93
      %p95 = scmp.ne.s32.totalorder %s84, %s85
      %p96 = scmp.eq.s32.totalorder %s23, 0
      %p97 = por %p95, %p96
      %p98 = scmp.ne.s32.totalorder %s84, %s85
      %p99 = scmp.eq.s32.totalorder %s24, 1
      %p100 = por %p98, %p99
      %p102 = scmp.ne.s32.totalorder %s85, %s101
      %p103 = scmp.eq.s32.totalorder %s24, 0
      %p104 = por %p102, %p103
      %s105 = ssub.s32 %s25, %s44
      %s106 = ssub.s32 %s26, %s40
      %s107 = sor.u32 %s105, %s106
      %s108 = ssub.s32 %s27, %s36
      %s109 = sor.u32 %s107, %s108
      %p110 = scmp.eq.s32.totalorder %s109, 0
      %s112 = sadd.s32 %s111, 1
      %s113 = scalar_select %p110, %s111, %s112
      %p116 = pneg %p110
      %p117 = scmp.eq.s32.totalorder %s18, 1
      %p118 = por %p116, %p117
      %p119 = scmp.ne.s32.totalorder %s111, %s114
      %p120 = scmp.eq.s32.totalorder %s18, 0
      %p121 = por %p119, %p120
      %p122 = scmp.ne.s32.totalorder %s111, %s114
      %p123 = scmp.eq.s32.totalorder %s23, 1
      %p124 = por %p122, %p123
      %p125 = scmp.ne.s32.totalorder %s114, %s115
      %p126 = scmp.eq.s32.totalorder %s23, 0
      %p127 = por %p125, %p126
      %p128 = scmp.ne.s32.totalorder %s114, %s115
      %p129 = scmp.eq.s32.totalorder %s24, 1
      %p130 = por %p128, %p129
      %p132 = scmp.ne.s32.totalorder %s115, %s131
      %p133 = scmp.eq.s32.totalorder %s24, 0
      %p134 = por %p132, %p133
      %s135 = ssub.s32 %s25, %s44
      %s136 = ssub.s32 %s26, %s40
      %s137 = sor.u32 %s135, %s136
      %p138 = scmp.eq.s32.totalorder %s137, 0
      %s140 = sadd.s32 %s139, 1
      %s141 = scalar_select %p138, %s139, %s140
      %p144 = pneg %p138
      %p145 = scmp.eq.s32.totalorder %s18, 1
      %p146 = por %p144, %p145
      %p147 = scmp.ne.s32.totalorder %s139, %s142
      %p148 = scmp.eq.s32.totalorder %s18, 0
      %p149 = por %p147, %p148
      %p150 = scmp.ne.s32.totalorder %s139, %s142
      %p151 = scmp.eq.s32.totalorder %s23, 1
      %p152 = por %p150, %p151
      %p153 = scmp.ne.s32.totalorder %s142, %s143
      %p154 = scmp.eq.s32.totalorder %s23, 0
      %p155 = por %p153, %p154
      %p156 = scmp.ne.s32.totalorder %s142, %s143
      %p157 = scmp.eq.s32.totalorder %s24, 1
      %p158 = por %p156, %p157
      %p160 = scmp.ne.s32.totalorder %s143, %s159
      %p161 = scmp.eq.s32.totalorder %s24, 0
      %p162 = por %p160, %p161
      %p163 = scmp.le.s32.totalorder 1, %s18
      %p164 = scmp.lt.s32.totalorder %s18, 3
      %p165 = pnand %p163, %p164
      %p166 = pneg %p165
      // Predicated region
      $region9: #{tpu_custom_call.1} parent=5 // pred_check
        _
      $region10: #{tpu_custom_call.1} parent=5 // pred_check_branch
        %168 = sbr.rel (%p165) target = $region12
      $region11: #{tpu_custom_call.1} parent=5 // pred_region
        %s169 = ssub.s32 %s18, 1
      $region12: #{tpu_custom_call.1} parent=5 // pred_fallthru
        _
      %p170 = scmp.lt.s32.totalorder %s18, 2
      // Predicated region
      $region13: #{tpu_custom_call.1} parent=5 // pred_check
        %p171 = pneg %p170
      $region14: #{tpu_custom_call.1} parent=5 // pred_check_branch
        %173 = sbr.rel (%p171) target = $region16
      $region15: #{tpu_custom_call.1} parent=5 // pred_region
        // Predicated region
        $region17: #{tpu_custom_call.1} parent=15 // pred_check
          %p174 = pneg %p61
        $region18: #{tpu_custom_call.1} parent=15 // pred_check_branch
          %176 = sbr.rel (%p174) target = $region20
        $region19: #{tpu_custom_call.1} parent=15 // pred_region
          %s177 = sand.u32 %s51, 1
          %s178 = scalar_lea.sflag [#allocation3], %s177
          %s179 = sand.u32 %s51, 1
          %s180 = smul.addr %s179, 48
          %s181 = scalar_lea.vmem [#allocation2], %s180
          %s182 = smul.u32 2, %s26
          %s184 = ssub.s32 768, 768
          %185 = vsyncadd %s178, %s184
          %s186 = sadd.s32 %s27, %s182
          %s187 = smul.addr %s25, 6
          %s188 = sadd.s32 %s186, %s187
          %s189 = smul.addr %s188, 128
          %s190 = scalar_lea.hbm %s0, %s189
          %s191 = sshll.u32 %s181, 4
          %s192 = int_to_ptr.vmem [resolvable:$true] %s191
          %197 = dma.hbm_to_vmem [thread:$0]  %s190, 768, %s192, %s178, 128, 128, 8
        $region20: #{tpu_custom_call.1} parent=15 // pred_fallthru
          _
        // Predicated region
        $region21: #{tpu_custom_call.1} parent=15 // pred_check
          %p198 = pneg %p91
        $region22: #{tpu_custom_call.1} parent=15 // pred_check_branch
          %200 = sbr.rel (%p198) target = $region24
        $region23: #{tpu_custom_call.1} parent=15 // pred_region
          %s201 = sand.u32 %s18, 1
          %s202 = scalar_lea.sflag [#allocation6], %s201
          %s203 = sand.u32 %s81, 1
          %s204 = smul.addr %s203, 48
          %s205 = scalar_lea.vmem [#allocation5], %s204
          %s206 = smul.u32 2, %s26
          %s208 = ssub.s32 768, 768
          %209 = vsyncadd %s202, %s208
          %s210 = sadd.s32 %s27, %s206
          %s211 = smul.addr %s25, 6
          %s212 = sadd.s32 %s210, %s211
          %s213 = smul.addr %s212, 128
          %s214 = scalar_lea.hbm %s1, %s213
          %s215 = sshll.u32 %s205, 4
          %s216 = int_to_ptr.vmem [resolvable:$true] %s215
          %221 = dma.hbm_to_vmem [thread:$0]  %s214, 768, %s216, %s202, 128, 128, 8
        $region24: #{tpu_custom_call.1} parent=15 // pred_fallthru
          _
        // Predicated region
        $region25: #{tpu_custom_call.1} parent=15 // pred_check
          %p222 = pneg %p121
        $region26: #{tpu_custom_call.1} parent=15 // pred_check_branch
          %224 = sbr.rel (%p222) target = $region28
        $region27: #{tpu_custom_call.1} parent=15 // pred_region
          %s225 = sand.u32 %s18, 1
          %s226 = scalar_lea.sflag [#allocation6], %s225
          %s227 = sand.u32 %s111, 1
          %s228 = smul.addr %s227, 4
          %s229 = scalar_lea.vmem [#allocation7], %s228
          %s230 = smul.u32 2, %s26
          %s232 = ssub.s32 64, 64
          %233 = vsyncadd %s226, %s232
          %s234 = sadd.s32 %s27, %s230
          %s235 = smul.addr %s25, 2
          %s236 = sadd.s32 %s234, %s235
          %s237 = smul.addr %s236, 32
          %s238 = scalar_lea.hbm %s2, %s237
          %s239 = sshll.u32 %s229, 4
          %s240 = int_to_ptr.vmem [resolvable:$true] %s239
          %245 = dma.hbm_to_vmem [thread:$0]  %s238, 64, %s240, %s226, 32, 32, 2
        $region28: #{tpu_custom_call.1} parent=15 // pred_fallthru
          _
      $region16: #{tpu_custom_call.1} parent=5 // pred_fallthru
        _
      %p246 = scmp.le.s32.totalorder 1, %s18
      %p247 = scmp.lt.s32.totalorder %s18, 3
      %p248 = pnand %p246, %p247
      %p249 = pneg %p248
      // Predicated region
      $region29: #{tpu_custom_call.1} parent=5 // pred_check
        _
      $region30: #{tpu_custom_call.1} parent=5 // pred_check_branch
        %251 = sbr.rel (%p248) target = $region32
      $region31: #{tpu_custom_call.1} parent=5 // pred_region
        %s252 = ssub.s32 %s18, 1
        %s253 = sand.u32 %s54, 1
        %s254 = scalar_lea.sflag [#allocation3], %s253
        %s255 = sand.u32 %s54, 1
        %s256 = smul.addr %s255, 48
        %s257 = scalar_lea.vmem [#allocation2], %s256
        // Predicated region
        $region33: #{tpu_custom_call.1} parent=31 // pred_check
          %p258 = pneg %p67
        $region34: #{tpu_custom_call.1} parent=31 // pred_check_branch
          %260 = sbr.rel (%p258) target = $region36
        $region35: #{tpu_custom_call.1} parent=31 // pred_region
          %261 = dma.done %s254, 768
        $region36: #{tpu_custom_call.1} parent=31 // pred_fallthru
          _
        %s262 = sand.u32 %s23, 1
        %s263 = scalar_lea.sflag [#allocation6], %s262
        %s264 = sand.u32 %s84, 1
        %s265 = smul.addr %s264, 48
        %s266 = scalar_lea.vmem [#allocation5], %s265
        // Predicated region
        $region37: #{tpu_custom_call.1} parent=31 // pred_check
          %p267 = pneg %p97
        $region38: #{tpu_custom_call.1} parent=31 // pred_check_branch
          %269 = sbr.rel (%p267) target = $region40
        $region39: #{tpu_custom_call.1} parent=31 // pred_region
          %270 = dma.done %s263, 768
        $region40: #{tpu_custom_call.1} parent=31 // pred_fallthru
          _
        %s271 = sand.u32 %s23, 1
        %s272 = scalar_lea.sflag [#allocation6], %s271
        %s273 = sand.u32 %s114, 1
        %s274 = smul.addr %s273, 4
        %s275 = scalar_lea.vmem [#allocation7], %s274
        // Predicated region
        $region41: #{tpu_custom_call.1} parent=31 // pred_check
          %p276 = pneg %p127
        $region42: #{tpu_custom_call.1} parent=31 // pred_check_branch
          %278 = sbr.rel (%p276) target = $region44
        $region43: #{tpu_custom_call.1} parent=31 // pred_region
          %279 = dma.done %s272, 64
        $region44: #{tpu_custom_call.1} parent=31 // pred_fallthru
          _
        %s280 = sand.u32 %s54, 1
        %s281 = scalar_lea.sflag [#allocation3], %s280
        %s282 = sand.u32 %s54, 1
        %s283 = smul.addr %s282, 48
        %s284 = scalar_lea.vmem [#allocation2], %s283
        %p285 = pneg %p67
        %p286 = pneg %p64
        %s287 = sand.u32 %s23, 1
        %s288 = scalar_lea.sflag [#allocation6], %s287
        %s289 = sand.u32 %s84, 1
        %s290 = smul.addr %s289, 48
        %s291 = scalar_lea.vmem [#allocation5], %s290
        %p292 = pneg %p97
        %p293 = pneg %p94
        %s294 = sand.u32 %s23, 1
        %s295 = scalar_lea.sflag [#allocation6], %s294
        %s296 = sand.u32 %s114, 1
        %s297 = smul.addr %s296, 4
        %s298 = scalar_lea.vmem [#allocation7], %s297
        %p299 = pneg %p127
        %p300 = pneg %p124
        %p301 = pneg %p155
        %p302 = pneg %p152
        %s303 = sand.u32 %s142, 1
        %s304 = scalar_lea.sflag [#allocation4], %s303
        %s305 = sand.u32 %s142, 1
        %s306 = smul.addr %s305, 8
        %s307 = scalar_lea.vmem [#allocation8], %s306
        %s308 = smul.u32 2, %s29
        %s309 = smul.u32 2, %s29
        %s310 = smul.u32 2, %s29
        %p313 = scmp.eq.s32.totalorder %s30, 0
        // Predicated region
        $region45: #{tpu_custom_call.1} parent=31 // pred_check
          %p314 = pneg %p313
        $region46: #{tpu_custom_call.1} parent=31 // pred_check_branch
          %316 = sbr.rel (%p314) target = $region48
        $region47: #{tpu_custom_call.1} parent=31 // pred_region
          %vm317 = vcmask 130048
          %318 = vst.msk [vmem:[%s307] sm:$0xff] %vm317, 0.0
        $region48: #{tpu_custom_call.1} parent=31 // pred_fallthru
          _
        %v319 = vld [vmem:[%s257] sm:$0xff]
        %v320 = vld [vmem:[%s257 + $0x8] sm:$0xff]
        %v321 = vld [vmem:[%s257 + $0x10] sm:$0xff]
        %v322 = vld [vmem:[%s257 + $0x18] sm:$0xff]
        %v323 = vld [vmem:[%s257 + $0x20] sm:$0xff]
        %v324 = vld [vmem:[%s257 + $0x28] sm:$0xff]
        %v325 = vld [vmem:[%s266] sm:$0xff]
        %v326 = vld [vmem:[%s266 + $0x8] sm:$0xff]
        %v327 = vld [vmem:[%s266 + $0x10] sm:$0xff]
        %v328 = vld [vmem:[%s266 + $0x18] sm:$0xff]
        %v329 = vld [vmem:[%s266 + $0x20] sm:$0xff]
        %v330 = vld [vmem:[%s266 + $0x28] sm:$0xff]
        %v331 = vsub.f32 %v325, %v319
        %v332 = vsub.f32 %v326, %v320
        %v333 = vsub.f32 %v327, %v321
        %v334 = vsub.f32 %v328, %v322
        %v335 = vsub.f32 %v329, %v323
        %v336 = vsub.f32 %v330, %v324
        %v337 = vmul.f32 %v331, %v331
        %v338 = vmul.f32 %v332, %v332
        %v339 = vmul.f32 %v333, %v333
        %v340 = vmul.f32 %v334, %v334
        %v341 = vmul.f32 %v335, %v335
        %v342 = vmul.f32 %v336, %v336
        %vm343 = vcmask 130048
        %v344 = vsel %vm343, %v337, 0.0
        %v345 = vsel %vm343, %v339, 0.0
        %v346 = vadd.f32 %v344, %v345
        %v347 = vsel %vm343, %v341, 0.0
        %v348 = vadd.f32 %v346, %v347
        %v349 = vsel %vm343, %v338, 0.0
        %v350 = vsel %vm343, %v340, 0.0
        %v351 = vadd.f32 %v349, %v350
        %v352 = vsel %vm343, %v342, 0.0
        %v353 = vadd.f32 %v351, %v352
        %v354 = vld [vmem:[%s275] sm:$0x3]
        %v355 = vld [vmem:[%s275 + $0x2] sm:$0x3]
        %vm356 = vnez %v354
        %vm357 = vnez %v355
        %v358 = vsel %vm356, 16843009, 0
        %v359 = vsel %vm357, 16843009, 0
        %v360 = vunpack.c.0.s8 %v358
        %v361 = vunpack.c.0.s8 %v359
        %vm362 = vcmp.ne.s32.totalorder %v360, 0
        %vm363 = vcmp.ne.s32.totalorder %v361, 0
        %v364 = vsel %vm362, %v348, 0.0
        %v365 = vsel %vm363, %v353, 0.0
        %v366 = vadd.f32 %v364, %v365
        %v367 = vld [vmem:[%s307] sm:$0xff]
        %v368 = vadd.f32 %v367, %v366
        %369 = vst.msk [vmem:[%s307] sm:$0xff] %vm343, %v368
        %s370 = sand.u32 %s142, 1
        %s371 = scalar_lea.sflag [#allocation4], %s370
        %s372 = sand.u32 %s142, 1
        %s373 = smul.addr %s372, 8
        %s374 = scalar_lea.vmem [#allocation8], %s373
        // Predicated region
        $region49: #{tpu_custom_call.1} parent=31 // pred_check
          %p375 = pneg %p152
        $region50: #{tpu_custom_call.1} parent=31 // pred_check_branch
          %377 = sbr.rel (%p375) target = $region52
        $region51: #{tpu_custom_call.1} parent=31 // pred_region
          %s379 = ssub.s32 128, 128
          %380 = vsyncadd %s371, %s379
          %s381 = sadd.s32 %s29, %s28
          %s382 = smul.addr %s381, 128
          %s383 = scalar_lea.hbm %s3, %s382
          %s385 = sshll.u32 %s374, 4
          %s386 = int_to_ptr.vmem [resolvable:$true] %s385
          %388 = dma.vmem_to_hbm [thread:$0]  %s386, 128, %s383, %s371
        $region52: #{tpu_custom_call.1} parent=31 // pred_fallthru
          _
      $region32: #{tpu_custom_call.1} parent=5 // pred_fallthru
        _
      %p389 = scmp.le.s32.totalorder 2, %s18
      // Predicated region
      $region53: #{tpu_custom_call.1} parent=5 // pred_check
        %p390 = pneg %p389
      $region54: #{tpu_custom_call.1} parent=5 // pred_check_branch
        %392 = sbr.rel (%p390) target = $region56
      $region55: #{tpu_custom_call.1} parent=5 // pred_region
        %s393 = ssub.s32 %s18, 2
        // Predicated region
        $region57: #{tpu_custom_call.1} parent=55 // pred_check
          %p394 = pneg %p158
        $region58: #{tpu_custom_call.1} parent=55 // pred_check_branch
          %396 = sbr.rel (%p394) target = $region60
        $region59: #{tpu_custom_call.1} parent=55 // pred_region
          %s397 = sand.u32 %s143, 1
          %s398 = scalar_lea.sflag [#allocation4], %s397
          %s399 = sand.u32 %s143, 1
          %s400 = smul.addr %s399, 8
          %s401 = scalar_lea.vmem [#allocation8], %s400
          %402 = dma.done %s398, 128
        $region60: #{tpu_custom_call.1} parent=55 // pred_fallthru
          _
      $region56: #{tpu_custom_call.1} parent=5 // pred_fallthru
        _
    $region6: #{tpu_custom_call.1} parent=1 // loop_footer
      %s22 = sadd.s32 1, %s18
    $region7: #{tpu_custom_call.1} parent=1 // loop_footer_branch
      %17 = sbr.rel target = $region3
    $region8: #{tpu_custom_call.1} parent=1 // loop_exit
      _
    %403 = vsyncpa [#allocation3], 1
    %s404 = scalar_lea.sflag [#allocation3], 1
    %405 = vsyncpa %s404, 1
    %406 = vsyncpa [#allocation6], 1
    %s407 = scalar_lea.sflag [#allocation6], 1
    %408 = vsyncpa %s407, 1
    %409 = vsyncpa [#allocation4], 1
    %s410 = scalar_lea.sflag [#allocation4], 1
    %411 = vsyncpa %s410, 1

</llo_original>
